<compile_context>
chip_gen: v6e
topology: v6e:2x2x1
jax: 0.10.0
libtpu: 0.0.40
codegen_flags: <defaults>
</compile_context>

<pallas_src>
import jax
import jax.numpy as jnp
from jax.experimental import pallas as pl
from jax.experimental.pallas import tpu as pltpu


def value_network_kernel(x_ref, w0_ref, b0_ref, w1_ref, b1_ref,
                         wv_ref, bv_ref, val_ref):
    """LinearEncoder (Linear+Swish x2) followed by fused ValueHeads."""
    x = x_ref[...]                                                  # [B, enc_in]

    # LinearEncoder layer 0: Linear -> Swish   (Swish(z) = z * sigmoid(z))
    z0 = jnp.dot(x, w0_ref[...], preferred_element_type=jnp.float32) + b0_ref[...]
    h0 = z0 * (1.0 / (1.0 + jnp.exp(-z0)))                          # exp on EUP

    # LinearEncoder layer 1: Linear -> Swish
    z1 = jnp.dot(h0, w1_ref[...], preferred_element_type=jnp.float32) + b1_ref[...]
    h1 = z1 * (1.0 / (1.0 + jnp.exp(-z1)))

    # ValueHeads: all reward-stream heads fused into a single matmul.
    val_ref[...] = (jnp.dot(h1, wv_ref[...], preferred_element_type=jnp.float32)
                    + bv_ref[...])                                  # [B, S*O]


def value_network_forward(obs_list, params, stream_names,
                          outputs_per_stream=1, memories=None):
    # ObservationEncoder with identity VectorInput processors == concat(dim=1).
    # (Pure layout plumbing, kept in the wrapper.)
    encoded_self = jnp.concatenate([o.astype(jnp.float32) for o in obs_list], axis=1)
    # TODO(synk): RSA/EntityEmbedding, LSTM memories, ConditionalEncoder (goal
    # conditioning) and action concatenation paths are not implemented.

    w0, b0 = params["w0"], params["b0"]
    w1, b1 = params["w1"], params["b1"]
    wv, bv = params["wv"], params["bv"]
    B = encoded_self.shape[0]
    n_out = wv.shape[1]

    operands = (encoded_self, w0, b0, w1, b1, wv, bv)
    bytes_accessed = int(sum(a.size * a.dtype.itemsize for a in operands)
                         + B * n_out * 4)
    flops = int(2 * B * (w0.shape[0] * w0.shape[1]
                         + w1.shape[0] * w1.shape[1]
                         + wv.shape[0] * n_out))
    transcendentals = int(B * (w0.shape[1] + w1.shape[1]))   # one exp per Swish elem

    vmem_spec = pl.BlockSpec(memory_space=pltpu.MemorySpace.VMEM)
    vals = pl.pallas_call(
        value_network_kernel,
        out_shape=jax.ShapeDtypeStruct((B, n_out), jnp.float32),
        in_specs=[vmem_spec] * len(operands),
        out_specs=vmem_spec,
        cost_estimate=pl.CostEstimate(flops=flops,
                                      transcendentals=transcendentals,
                                      bytes_accessed=bytes_accessed),
    )(*operands)

    # ValueHeads returns {stream_name: head(hidden).squeeze(-1)}.
    outputs = {}
    for i, name in enumerate(stream_names):
        head = vals[:, i * outputs_per_stream:(i + 1) * outputs_per_stream]
        outputs[name] = jnp.squeeze(head, axis=-1) if outputs_per_stream == 1 else head
    return outputs, memories


def value_network_reference(obs_list, params, stream_names,
                            outputs_per_stream=1, memories=None):
    """Pure-JAX reference mirroring the PyTorch module exactly."""
    x = jnp.concatenate(obs_list, axis=1)
    z0 = x @ params["w0"] + params["b0"]
    h0 = z0 * jax.nn.sigmoid(z0)
    z1 = h0 @ params["w1"] + params["b1"]
    h1 = z1 * jax.nn.sigmoid(z1)
    vals = h1 @ params["wv"] + params["bv"]
    outputs = {}
    for i, name in enumerate(stream_names):
        head = vals[:, i * outputs_per_stream:(i + 1) * outputs_per_stream]
        outputs[name] = jnp.squeeze(head, axis=-1) if outputs_per_stream == 1 else head
    return outputs, memories


if __name__ == "__main__":
    # Small shapes consistent with the module's forward.
    B = 8                                  # batch of agents
    obs_dims = (12, 20)                    # two vector observation specs
    h_size = 32                            # network_settings.hidden_units
    stream_names = ["extrinsic", "curiosity"]
    outputs_per_stream = 1
    enc_in = sum(obs_dims)                 # ObservationEncoder.total_enc_size

    key = jax.random.PRNGKey(0)
    ks = jax.random.split(key, 8)

    obs_list = [
        jax.random.normal(ks[0], (B, obs_dims[0]), dtype=jnp.float32),
        jax.random.normal(ks[1], (B, obs_dims[1]), dtype=jnp.float32),
    ]

    def lin_init(kw, kb, fan_in, fan_out):
        scale = 1.0 / jnp.sqrt(jnp.float32(fan_in))
        w = jax.random.normal(kw, (fan_in, fan_out), dtype=jnp.float32) * scale
        b = jax.random.normal(kb, (1, fan_out), dtype=jnp.float32) * 0.1
        return w, b

    # LinearEncoder (num_layers=2)
    w0, b0 = lin_init(ks[2], ks[3], enc_in, h_size)
    w1, b1 = lin_init(ks[4], ks[5], h_size, h_size)
    # ValueHeads fused: per-stream Linear(h_size, outputs_per_stream) weights
    # concatenated along the output dim.
    wv, bv = lin_init(ks[6], ks[7], h_size, len(stream_names) * outputs_per_stream)

    params = dict(w0=w0, b0=b0, w1=w1, b1=b1, wv=wv, bv=bv)

    out, mem = value_network_forward(obs_list, params, stream_names,
                                     outputs_per_stream)
    out = jax.block_until_ready(out)

    ref, _ = value_network_reference(obs_list, params, stream_names,
                                     outputs_per_stream)
    for name in stream_names:
        assert out[name].shape == (B,), (name, out[name].shape)
        assert jnp.allclose(out[name], ref[name], rtol=1e-5, atol=1e-5), (
            name, out[name], ref[name])
    assert mem is None   # no LSTM -> memories passed through unchanged

    print("KERNEL_OK")
</pallas_src>

<mosaic_0001>
module attributes {stable_mosaic.version = 11 : i64} {
  func.func @value_network_kernel(%arg0: memref<8x32xf32, #tpu.memory_space<vmem>>, %arg1: memref<32x32xf32, #tpu.memory_space<vmem>>, %arg2: memref<1x32xf32, #tpu.memory_space<vmem>>, %arg3: memref<32x32xf32, #tpu.memory_space<vmem>>, %arg4: memref<1x32xf32, #tpu.memory_space<vmem>>, %arg5: memref<32x2xf32, #tpu.memory_space<vmem>>, %arg6: memref<1x2xf32, #tpu.memory_space<vmem>>, %arg7: memref<8x2xf32, #tpu.memory_space<vmem>>) attributes {dimension_semantics = [], scalar_prefetch = 0 : i64, scratch_operands = 0 : i64, tpu.core_type = #tpu.core_type<tc>} {
    %c0 = arith.constant 0 : index
    %c0_0 = arith.constant 0 : index
    %0 = vector.load %arg0[%c0, %c0_0] : memref<8x32xf32, #tpu.memory_space<vmem>>, vector<8x32xf32>
    %c0_1 = arith.constant 0 : index
    %c0_2 = arith.constant 0 : index
    %1 = vector.load %arg1[%c0_1, %c0_2] : memref<32x32xf32, #tpu.memory_space<vmem>>, vector<32x32xf32>
    %cst = arith.constant dense<0.000000e+00> : vector<8x32xf32>
    %2 = tpu.matmul %0, %1, %cst {dimension_numbers = #tpu.dot_dimension_numbers<[1], [0], [0], [1], [0, 0, 1, 1], [], []>} : vector<8x32xf32>, vector<32x32xf32>, vector<8x32xf32> -> vector<8x32xf32>
    %c0_3 = arith.constant 0 : index
    %c0_4 = arith.constant 0 : index
    %3 = vector.load %arg2[%c0_3, %c0_4] : memref<1x32xf32, #tpu.memory_space<vmem>>, vector<1x32xf32>
    %4 = vector.broadcast %3 : vector<1x32xf32> to vector<8x32xf32>
    %5 = arith.addf %2, %4 : vector<8x32xf32>
    %cst_5 = arith.constant 0.000000e+00 : f32
    %6 = vector.broadcast %cst_5 : f32 to vector<8x32xf32>
    %7 = arith.subf %6, %5 : vector<8x32xf32>
    %8 = math.exp %7 : vector<8x32xf32>
    %cst_6 = arith.constant 1.000000e+00 : f32
    %9 = vector.broadcast %cst_6 : f32 to vector<8x32xf32>
    %10 = arith.addf %9, %8 : vector<8x32xf32>
    %cst_7 = arith.constant 1.000000e+00 : f32
    %11 = vector.broadcast %cst_7 : f32 to vector<8x32xf32>
    %12 = arith.divf %11, %10 : vector<8x32xf32>
    %13 = arith.mulf %5, %12 : vector<8x32xf32>
    %c0_8 = arith.constant 0 : index
    %c0_9 = arith.constant 0 : index
    %14 = vector.load %arg3[%c0_8, %c0_9] : memref<32x32xf32, #tpu.memory_space<vmem>>, vector<32x32xf32>
    %cst_10 = arith.constant dense<0.000000e+00> : vector<8x32xf32>
    %15 = tpu.matmul %13, %14, %cst_10 {dimension_numbers = #tpu.dot_dimension_numbers<[1], [0], [0], [1], [0, 0, 1, 1], [], []>} : vector<8x32xf32>, vector<32x32xf32>, vector<8x32xf32> -> vector<8x32xf32>
    %c0_11 = arith.constant 0 : index
    %c0_12 = arith.constant 0 : index
    %16 = vector.load %arg4[%c0_11, %c0_12] : memref<1x32xf32, #tpu.memory_space<vmem>>, vector<1x32xf32>
    %17 = vector.broadcast %16 : vector<1x32xf32> to vector<8x32xf32>
    %18 = arith.addf %15, %17 : vector<8x32xf32>
    %cst_13 = arith.constant 0.000000e+00 : f32
    %19 = vector.broadcast %cst_13 : f32 to vector<8x32xf32>
    %20 = arith.subf %19, %18 : vector<8x32xf32>
    %21 = math.exp %20 : vector<8x32xf32>
    %cst_14 = arith.constant 1.000000e+00 : f32
    %22 = vector.broadcast %cst_14 : f32 to vector<8x32xf32>
    %23 = arith.addf %22, %21 : vector<8x32xf32>
    %cst_15 = arith.constant 1.000000e+00 : f32
    %24 = vector.broadcast %cst_15 : f32 to vector<8x32xf32>
    %25 = arith.divf %24, %23 : vector<8x32xf32>
    %26 = arith.mulf %18, %25 : vector<8x32xf32>
    %c0_16 = arith.constant 0 : index
    %c0_17 = arith.constant 0 : index
    %27 = vector.load %arg5[%c0_16, %c0_17] : memref<32x2xf32, #tpu.memory_space<vmem>>, vector<32x2xf32>
    %cst_18 = arith.constant dense<0.000000e+00> : vector<8x2xf32>
    %28 = tpu.matmul %26, %27, %cst_18 {dimension_numbers = #tpu.dot_dimension_numbers<[1], [0], [0], [1], [0, 0, 1, 1], [], []>} : vector<8x32xf32>, vector<32x2xf32>, vector<8x2xf32> -> vector<8x2xf32>
    %c0_19 = arith.constant 0 : index
    %c0_20 = arith.constant 0 : index
    %29 = vector.load %arg6[%c0_19, %c0_20] : memref<1x2xf32, #tpu.memory_space<vmem>>, vector<1x2xf32>
    %30 = vector.broadcast %29 : vector<1x2xf32> to vector<8x2xf32>
    %31 = arith.addf %28, %30 : vector<8x2xf32>
    %c0_21 = arith.constant 0 : index
    %c0_22 = arith.constant 0 : index
    %32 = vector.load %arg7[%c0_21, %c0_22] : memref<8x2xf32, #tpu.memory_space<vmem>>, vector<8x2xf32>
    tpu.vector_store %arg7[%c0_21, %c0_22], %31 {strides = array<i32>} : memref<8x2xf32, #tpu.memory_space<vmem>>, vector<8x2xf32>,
    return
  }
}

</mosaic_0001>

<llo_original>
// kernel: tpu_custom_call.1
$region0: #{tpu_custom_call.1}
  #allocation0 [shape = 'u32[]', space=smem, size = 0x4, offset = 0x4, fixed_abs, tag = 'smem constant byte address 0x4 - core index']
  #allocation1 [shape = 'u32[144,128]{1,0:T(1,128)}', space=vmem, size = 0x12000, scoped, tag = 'internal scratch']
  %s0 = inlined_call_operand.hbm [shape: f32[8,32], index: 0, kind: input, shape index: {}]
  %s1 = inlined_call_operand.vmem [shape: f32[32,32], index: 1, kind: input, shape index: {}]
  %s2 = inlined_call_operand.vmem [shape: f32[1,32], index: 2, kind: input, shape index: {}]
  %s3 = inlined_call_operand.hbm [shape: f32[32,32], index: 3, kind: input, shape index: {}]
  %s4 = inlined_call_operand.vmem [shape: f32[1,32], index: 4, kind: input, shape index: {}]
  %s5 = inlined_call_operand.vmem [shape: f32[32,2], index: 5, kind: input, shape index: {}]
  %s6 = inlined_call_operand.vmem [shape: f32[1,2], index: 6, kind: input, shape index: {}]
  %s7 = inlined_call_operand.vmem [shape: f32[8,2], index: 7, kind: output, shape index: {}]
  %s8 = sld [smem:[#allocation0]]
  $region46: #{tpu_custom_call.1} parent=0
    _
  %s10 = ssub.s32 1, %s8
  %s11 = scalar_select 0, %s10, %s8
  $region1: #{tpu_custom_call.1} parent=0
    #allocation2 [shape = 'u8[4096]{0}', space=vmem, size = 0x1000, scoped, tag = 'input window, operand 0, single buffered']
    #allocation3 [shape = 's32[1]{0}', space=sflag, size = 0x4, scoped, tag = 'scoped memory for tpu_custom_call.1']
    #allocation4 [shape = 'u8[16384]{0}', space=vmem, size = 0x4000, scoped, tag = 'input window, operand 3, single buffered']
    #allocation5 [shape = 's32[1]{0}', space=sflag, size = 0x4, scoped, tag = 'scoped memory for tpu_custom_call.1']
    %12 = vsyncpa [#allocation3], 0
    %13 = vsyncpa [#allocation5], 0
    // Predicated region
    $region2: #{tpu_custom_call.1} parent=1 // pred_check
      _
    $region3: #{tpu_custom_call.1} parent=1 // pred_check_branch
      %15 = sbr.rel (0) target = $region5
    $region4: #{tpu_custom_call.1} parent=1 // pred_region
      %s17 = ssub.s32 128, 128
      %18 = vsyncadd [#allocation3], %s17
      %s20 = sshll.u32 [#allocation2], 4
      %s21 = int_to_ptr.vmem [resolvable:$true] %s20
      %23 = dma.hbm_to_vmem [thread:$0]  %s0, 128, %s21, [#allocation3]
    $region5: #{tpu_custom_call.1} parent=1 // pred_fallthru
      _
    // Predicated region
    $region6: #{tpu_custom_call.1} parent=1 // pred_check
      _
    $region7: #{tpu_custom_call.1} parent=1 // pred_check_branch
      %25 = sbr.rel (0) target = $region9
    $region8: #{tpu_custom_call.1} parent=1 // pred_region
      _
    $region9: #{tpu_custom_call.1} parent=1 // pred_fallthru
      _
    // Predicated region
    $region10: #{tpu_custom_call.1} parent=1 // pred_check
      _
    $region11: #{tpu_custom_call.1} parent=1 // pred_check_branch
      %27 = sbr.rel (0) target = $region13
    $region12: #{tpu_custom_call.1} parent=1 // pred_region
      _
    $region13: #{tpu_custom_call.1} parent=1 // pred_fallthru
      _
    // Predicated region
    $region14: #{tpu_custom_call.1} parent=1 // pred_check
      _
    $region15: #{tpu_custom_call.1} parent=1 // pred_check_branch
      %29 = sbr.rel (0) target = $region17
    $region16: #{tpu_custom_call.1} parent=1 // pred_region
      %s31 = ssub.s32 512, 512
      %32 = vsyncadd [#allocation5], %s31
      %s33 = sshll.u32 [#allocation4], 4
      %s34 = int_to_ptr.vmem [resolvable:$true] %s33
      %39 = dma.hbm_to_vmem [thread:$0]  %s3, 512, %s34, [#allocation5], 128, 128, 8
    $region17: #{tpu_custom_call.1} parent=1 // pred_fallthru
      _
    // Predicated region
    $region18: #{tpu_custom_call.1} parent=1 // pred_check
      _
    $region19: #{tpu_custom_call.1} parent=1 // pred_check_branch
      %41 = sbr.rel (0) target = $region21
    $region20: #{tpu_custom_call.1} parent=1 // pred_region
      _
    $region21: #{tpu_custom_call.1} parent=1 // pred_fallthru
      _
    // Predicated region
    $region22: #{tpu_custom_call.1} parent=1 // pred_check
      _
    $region23: #{tpu_custom_call.1} parent=1 // pred_check_branch
      %43 = sbr.rel (0) target = $region25
    $region24: #{tpu_custom_call.1} parent=1 // pred_region
      _
    $region25: #{tpu_custom_call.1} parent=1 // pred_fallthru
      _
    // Predicated region
    $region26: #{tpu_custom_call.1} parent=1 // pred_check
      _
    $region27: #{tpu_custom_call.1} parent=1 // pred_check_branch
      %45 = sbr.rel (0) target = $region29
    $region28: #{tpu_custom_call.1} parent=1 // pred_region
      _
    $region29: #{tpu_custom_call.1} parent=1 // pred_fallthru
      _
    // Predicated region
    $region30: #{tpu_custom_call.1} parent=1 // pred_check
      _
    $region31: #{tpu_custom_call.1} parent=1 // pred_check_branch
      %47 = sbr.rel (0) target = $region33
    $region32: #{tpu_custom_call.1} parent=1 // pred_region
      %48 = dma.done [#allocation3], 128
    $region33: #{tpu_custom_call.1} parent=1 // pred_fallthru
      _
    // Predicated region
    $region34: #{tpu_custom_call.1} parent=1 // pred_check
      _
    $region35: #{tpu_custom_call.1} parent=1 // pred_check_branch
      %50 = sbr.rel (0) target = $region37
    $region36: #{tpu_custom_call.1} parent=1 // pred_region
      %51 = dma.done [#allocation5], 512
    $region37: #{tpu_custom_call.1} parent=1 // pred_fallthru
      _
    %v52 = vld [vmem:[#allocation2] sm:$0xff]
    %v53 = vld [vmem:[%s1] sm:$0xff]
    %v54 = vld [vmem:[%s1 + $0x8] sm:$0xff]
    %v55 = vld [vmem:[%s1 + $0x10] sm:$0xff]
    %v56 = vld [vmem:[%s1 + $0x18] sm:$0xff]
    %v57 = vld [vmem:[%s2] sm:$0x1]
    %v59 = vlaneseq
    %v60 = vshrl.u32 %v59, 7
    %v61 = vsub.s32 0, %v60
    %v62 = vrot.slane %v57, %v61
    %vm64 = vcmask 261120
    %v66 = vsel %vm64, %v52, 0
    %68 = vmatprep.subr.mxu0 0.0
    %69 = vmatpush1.msra.mxu0 0.0
    %70 = vmatprep.subr.mxu0 0.0
    %71 = vmatpush1.msra.mxu0 0.0
    %72 = vmatprep.subr.mxu0 0.0
    %73 = vmatpush1.msra.mxu0 0.0
    %74 = vmatprep.subr.mxu0 0.0
    %75 = vmatpush1.msra.mxu0 0.0
    %76 = vmatprep.subr.mxu0 0.0
    %77 = vmatpush1.msra.mxu0 0.0
    %78 = vmatprep.subr.mxu0 0.0
    %79 = vmatpush1.msra.mxu0 0.0
    %80 = vmatprep.subr.mxu0 0.0
    %81 = vmatpush1.msra.mxu0 0.0
    %82 = vmatprep.subr.mxu0 0.0
    %83 = vmatpush1.msra.mxu0 0.0
    %84 = vmatprep.subr.mxu0 0.0
    %85 = vmatpush1.msra.mxu0 0.0
    %86 = vmatprep.subr.mxu0 0.0
    %87 = vmatpush1.msra.mxu0 0.0
    %88 = vmatprep.subr.mxu0 0.0
    %89 = vmatpush1.msra.mxu0 0.0
    %90 = vmatprep.subr.mxu0 0.0
    %91 = vmatpush1.msra.mxu0 0.0
    %92 = vmatprep.subr.mxu0 0.0
    %93 = vmatpush1.msra.mxu0 %v56
    %94 = vmatprep.subr.mxu0 0.0
    %95 = vmatpush1.msra.mxu0 %v55
    %96 = vmatprep.subr.mxu0 0.0
    %97 = vmatpush1.msra.mxu0 %v54
    %98 = vmatprep.subr.mxu0 0.0
    %99 = vmatpush1.msra.mxu0 %v53
    %100 = vmatprep.subr.mxu0 0.0
    %101 = vmatpush2.msra.mxu0 0.0
    %102 = vmatprep.subr.mxu0 0.0
    %103 = vmatpush2.msra.mxu0 0.0
    %104 = vmatprep.subr.mxu0 0.0
    %105 = vmatpush2.msra.mxu0 0.0
    %106 = vmatprep.subr.mxu0 0.0
    %107 = vmatpush2.msra.mxu0 0.0
    %108 = vmatprep.subr.mxu0 0.0
    %109 = vmatpush2.msra.mxu0 0.0
    %110 = vmatprep.subr.mxu0 0.0
    %111 = vmatpush2.msra.mxu0 0.0
    %112 = vmatprep.subr.mxu0 0.0
    %113 = vmatpush2.msra.mxu0 0.0
    %114 = vmatprep.subr.mxu0 0.0
    %115 = vmatpush2.msra.mxu0 0.0
    %116 = vmatprep.subr.mxu0 0.0
    %117 = vmatpush2.msra.mxu0 0.0
    %118 = vmatprep.subr.mxu0 0.0
    %119 = vmatpush2.msra.mxu0 0.0
    %120 = vmatprep.subr.mxu0 0.0
    %121 = vmatpush2.msra.mxu0 0.0
    %122 = vmatprep.subr.mxu0 0.0
    %123 = vmatpush2.msra.mxu0 0.0
    %124 = vmatprep.subr.mxu0 0.0
    %125 = vmatpush2.msra.mxu0 0.0
    %126 = vmatprep.subr.mxu0 0.0
    %127 = vmatpush2.msra.mxu0 0.0
    %128 = vmatprep.subr.mxu0 0.0
    %129 = vmatpush2.msra.mxu0 0.0
    %130 = vmatprep.subr.mxu0 0.0
    %131 = vmatpush2.msra.mxu0 0.0
    %132 = vmatprep.mubr.f32.mxu0 0.0
    %133 = vmatmul.mubr.f32.gmra.mxu0 %v66
    %v134 = vpop.f32.mrf.mxu0
    %v135 = vadd.f32 %v62, %v134
    %v136 = vpop.f32.mrf.mxu0
    %137 = vdwg.mxu0
    %v138 = vsub.f32 0.0, %v135
    %v139 = vmul.f32 %v138, 1.442695
    %v140 = vpow.pop %v139
    %v141 = vadd.f32 %v140, 1.0
    %v142 = vrcp.pop %v141
    %v143 = vmul.f32 1.0, %v142
    %v144 = vmul.f32 %v135, %v143
    %v145 = vld [vmem:[#allocation4] sm:$0xff]
    %v146 = vld [vmem:[#allocation4 + $0x8] sm:$0xff]
    %v147 = vld [vmem:[#allocation4 + $0x10] sm:$0xff]
    %v148 = vld [vmem:[#allocation4 + $0x18] sm:$0xff]
    %v149 = vld [vmem:[%s4] sm:$0x1]
    %v151 = vlaneseq
    %v152 = vshrl.u32 %v151, 7
    %v153 = vsub.s32 0, %v152
    %v154 = vrot.slane %v149, %v153
    %v157 = vsel %vm64, %v144, 0
    %159 = vmatprep.subr.mxu0 0.0
    %160 = vmatpush1.msra.mxu0 0.0
    %161 = vmatprep.subr.mxu0 0.0
    %162 = vmatpush1.msra.mxu0 0.0
    %163 = vmatprep.subr.mxu0 0.0
    %164 = vmatpush1.msra.mxu0 0.0
    %165 = vmatprep.subr.mxu0 0.0
    %166 = vmatpush1.msra.mxu0 0.0
    %167 = vmatprep.subr.mxu0 0.0
    %168 = vmatpush1.msra.mxu0 0.0
    %169 = vmatprep.subr.mxu0 0.0
    %170 = vmatpush1.msra.mxu0 0.0
    %171 = vmatprep.subr.mxu0 0.0
    %172 = vmatpush1.msra.mxu0 0.0
    %173 = vmatprep.subr.mxu0 0.0
    %174 = vmatpush1.msra.mxu0 0.0
    %175 = vmatprep.subr.mxu0 0.0
    %176 = vmatpush1.msra.mxu0 0.0
    %177 = vmatprep.subr.mxu0 0.0
    %178 = vmatpush1.msra.mxu0 0.0
    %179 = vmatprep.subr.mxu0 0.0
    %180 = vmatpush1.msra.mxu0 0.0
    %181 = vmatprep.subr.mxu0 0.0
    %182 = vmatpush1.msra.mxu0 0.0
    %183 = vmatprep.subr.mxu0 0.0
    %184 = vmatpush1.msra.mxu0 %v148
    %185 = vmatprep.subr.mxu0 0.0
    %186 = vmatpush1.msra.mxu0 %v147
    %187 = vmatprep.subr.mxu0 0.0
    %188 = vmatpush1.msra.mxu0 %v146
    %189 = vmatprep.subr.mxu0 0.0
    %190 = vmatpush1.msra.mxu0 %v145
    %191 = vmatprep.subr.mxu0 0.0
    %192 = vmatpush2.msra.mxu0 0.0
    %193 = vmatprep.subr.mxu0 0.0
    %194 = vmatpush2.msra.mxu0 0.0
    %195 = vmatprep.subr.mxu0 0.0
    %196 = vmatpush2.msra.mxu0 0.0
    %197 = vmatprep.subr.mxu0 0.0
    %198 = vmatpush2.msra.mxu0 0.0
    %199 = vmatprep.subr.mxu0 0.0
    %200 = vmatpush2.msra.mxu0 0.0
    %201 = vmatprep.subr.mxu0 0.0
    %202 = vmatpush2.msra.mxu0 0.0
    %203 = vmatprep.subr.mxu0 0.0
    %204 = vmatpush2.msra.mxu0 0.0
    %205 = vmatprep.subr.mxu0 0.0
    %206 = vmatpush2.msra.mxu0 0.0
    %207 = vmatprep.subr.mxu0 0.0
    %208 = vmatpush2.msra.mxu0 0.0
    %209 = vmatprep.subr.mxu0 0.0
    %210 = vmatpush2.msra.mxu0 0.0
    %211 = vmatprep.subr.mxu0 0.0
    %212 = vmatpush2.msra.mxu0 0.0
    %213 = vmatprep.subr.mxu0 0.0
    %214 = vmatpush2.msra.mxu0 0.0
    %215 = vmatprep.subr.mxu0 0.0
    %216 = vmatpush2.msra.mxu0 0.0
    %217 = vmatprep.subr.mxu0 0.0
    %218 = vmatpush2.msra.mxu0 0.0
    %219 = vmatprep.subr.mxu0 0.0
    %220 = vmatpush2.msra.mxu0 0.0
    %221 = vmatprep.subr.mxu0 0.0
    %222 = vmatpush2.msra.mxu0 0.0
    %223 = vmatprep.mubr.f32.mxu0 0.0
    %224 = vmatmul.mubr.f32.gmra.mxu0 %v157
    %v225 = vpop.f32.mrf.mxu0
    %v226 = vadd.f32 %v154, %v225
    %v227 = vpop.f32.mrf.mxu0
    %228 = vdwg.mxu0
    %v229 = vsub.f32 0.0, %v226
    %v230 = vmul.f32 %v229, 1.442695
    %v231 = vpow.pop %v230
    %v232 = vadd.f32 %v231, 1.0
    %v233 = vrcp.pop %v232
    %v234 = vmul.f32 1.0, %v233
    %v235 = vmul.f32 %v226, %v234
    %v236 = vld [vmem:[%s5] sm:$0xff]
    %v237 = vld [vmem:[%s5 + $0x8] sm:$0xff]
    %v238 = vld [vmem:[%s5 + $0x10] sm:$0xff]
    %v239 = vld [vmem:[%s5 + $0x18] sm:$0xff]
    %v240 = vld [vmem:[%s6] sm:$0x1]
    %v242 = vlaneseq
    %v243 = vshrl.u32 %v242, 7
    %v244 = vsub.s32 0, %v243
    %v245 = vrot.slane %v240, %v244
    %v248 = vsel %vm64, %v235, 0
    %250 = vmatprep.subr.mxu0 0.0
    %251 = vmatpush1.msra.mxu0 0.0
    %252 = vmatprep.subr.mxu0 0.0
    %253 = vmatpush1.msra.mxu0 0.0
    %254 = vmatprep.subr.mxu0 0.0
    %255 = vmatpush1.msra.mxu0 0.0
    %256 = vmatprep.subr.mxu0 0.0
    %257 = vmatpush1.msra.mxu0 0.0
    %258 = vmatprep.subr.mxu0 0.0
    %259 = vmatpush1.msra.mxu0 0.0
    %260 = vmatprep.subr.mxu0 0.0
    %261 = vmatpush1.msra.mxu0 0.0
    %262 = vmatprep.subr.mxu0 0.0
    %263 = vmatpush1.msra.mxu0 0.0
    %264 = vmatprep.subr.mxu0 0.0
    %265 = vmatpush1.msra.mxu0 0.0
    %266 = vmatprep.subr.mxu0 0.0
    %267 = vmatpush1.msra.mxu0 0.0
    %268 = vmatprep.subr.mxu0 0.0
    %269 = vmatpush1.msra.mxu0 0.0
    %270 = vmatprep.subr.mxu0 0.0
    %271 = vmatpush1.msra.mxu0 0.0
    %272 = vmatprep.subr.mxu0 0.0
    %273 = vmatpush1.msra.mxu0 0.0
    %274 = vmatprep.subr.mxu0 0.0
    %275 = vmatpush1.msra.mxu0 %v239
    %276 = vmatprep.subr.mxu0 0.0
    %277 = vmatpush1.msra.mxu0 %v238
    %278 = vmatprep.subr.mxu0 0.0
    %279 = vmatpush1.msra.mxu0 %v237
    %280 = vmatprep.subr.mxu0 0.0
    %281 = vmatpush1.msra.mxu0 %v236
    %282 = vmatprep.subr.mxu0 0.0
    %283 = vmatpush2.msra.mxu0 0.0
    %284 = vmatprep.subr.mxu0 0.0
    %285 = vmatpush2.msra.mxu0 0.0
    %286 = vmatprep.subr.mxu0 0.0
    %287 = vmatpush2.msra.mxu0 0.0
    %288 = vmatprep.subr.mxu0 0.0
    %289 = vmatpush2.msra.mxu0 0.0
    %290 = vmatprep.subr.mxu0 0.0
    %291 = vmatpush2.msra.mxu0 0.0
    %292 = vmatprep.subr.mxu0 0.0
    %293 = vmatpush2.msra.mxu0 0.0
    %294 = vmatprep.subr.mxu0 0.0
    %295 = vmatpush2.msra.mxu0 0.0
    %296 = vmatprep.subr.mxu0 0.0
    %297 = vmatpush2.msra.mxu0 0.0
    %298 = vmatprep.subr.mxu0 0.0
    %299 = vmatpush2.msra.mxu0 0.0
    %300 = vmatprep.subr.mxu0 0.0
    %301 = vmatpush2.msra.mxu0 0.0
    %302 = vmatprep.subr.mxu0 0.0
    %303 = vmatpush2.msra.mxu0 0.0
    %304 = vmatprep.subr.mxu0 0.0
    %305 = vmatpush2.msra.mxu0 0.0
    %306 = vmatprep.subr.mxu0 0.0
    %307 = vmatpush2.msra.mxu0 0.0
    %308 = vmatprep.subr.mxu0 0.0
    %309 = vmatpush2.msra.mxu0 0.0
    %310 = vmatprep.subr.mxu0 0.0
    %311 = vmatpush2.msra.mxu0 0.0
    %312 = vmatprep.subr.mxu0 0.0
    %313 = vmatpush2.msra.mxu0 0.0
    %314 = vmatprep.mubr.f32.mxu0 0.0
    %315 = vmatmul.mubr.f32.gmra.mxu0 %v248
    %v316 = vpop.f32.mrf.mxu0
    %v317 = vadd.f32 %v245, %v316
    %v318 = vpop.f32.mrf.mxu0
    %319 = vdwg.mxu0
    %vm320 = vcmask 15360
    %321 = vst.msk [vmem:[%s7] sm:$0xff] %vm320, %v317
    // Predicated region
    $region38: #{tpu_custom_call.1} parent=1 // pred_check
      _
    $region39: #{tpu_custom_call.1} parent=1 // pred_check_branch
      %323 = sbr.rel (0) target = $region41
    $region40: #{tpu_custom_call.1} parent=1 // pred_region
      _
    $region41: #{tpu_custom_call.1} parent=1 // pred_fallthru
      _
    // Predicated region
    $region42: #{tpu_custom_call.1} parent=1 // pred_check
      _
    $region43: #{tpu_custom_call.1} parent=1 // pred_check_branch
      %325 = sbr.rel (0) target = $region45
    $region44: #{tpu_custom_call.1} parent=1 // pred_region
      _
    $region45: #{tpu_custom_call.1} parent=1 // pred_fallthru
      _
    %326 = vsyncpa [#allocation3], 1
    %327 = vsyncpa [#allocation5], 1

</llo_original>
